<compile_context>
chip_gen: v7x
topology: tpu7x:2x2x1
jax: 0.10.0
libtpu: 0.0.40
codegen_flags: <defaults>
</compile_context>

<pallas_src>
from functools import partial

import jax
import jax.numpy as jnp
from jax.experimental import pallas as pl
from jax.experimental.pallas import tpu as pltpu


def pos_embed_kernel(col_ref, row_ref, out_ref):
    """col_ref: (w, C)  col_embed.weight
       row_ref: (h, C)  row_embed.weight
       out_ref: (2, h, w, C)  slab 0 = col part, slab 1 = row part (C on lanes)."""
    _, h, w, C = out_ref.shape

    col = col_ref[...]                                          # (w, C)
    row = row_ref[...]                                          # (h, C)

    # out[0, y, x, c] = col[x, c]   (broadcast along y)
    out_ref[0] = jnp.broadcast_to(col[None, :, :], (h, w, C))
    # out[1, y, x, c] = row[y, c]   (broadcast along x)
    out_ref[1] = jnp.broadcast_to(row[:, None, :], (h, w, C))


@partial(jax.jit, static_argnums=(2,))
def position_embedding_learned(col_embed, row_embed, bs):
    """Builds the (bs, 2C, h, w) positional embedding (PyTorch NCHW layout)."""
    w, C = col_embed.shape
    h, C2 = row_embed.shape
    assert C == C2

    slab = pl.pallas_call(
        pos_embed_kernel,
        out_shape=jax.ShapeDtypeStruct((2, h, w, C), col_embed.dtype),
        in_specs=[
            pl.BlockSpec(memory_space=pltpu.MemorySpace.VMEM),   # col_embed (whole array)
            pl.BlockSpec(memory_space=pltpu.MemorySpace.VMEM),   # row_embed (whole array)
        ],
        out_specs=pl.BlockSpec(memory_space=pltpu.MemorySpace.VMEM),
    )(col_embed, row_embed)

    # Layout plumbing outside the kernel (fused by XLA under jit):
    # (2, h, w, C) -> (2, C, h, w) -> (2C, h, w) -> (bs, 2C, h, w)
    pos_img = slab.transpose(0, 3, 1, 2).reshape(2 * C, h, w)
    return jnp.broadcast_to(pos_img[None], (bs, 2 * C, h, w))


if __name__ == "__main__":
    # Small deterministic configuration (module defaults num_pos_feats=256, sz=20
    # scaled down; C=128 keeps the kernel's lane axis a full 128 wide).
    num_pos_feats = 128
    sz = 16
    bs = 2

    key = jax.random.PRNGKey(0)
    k_row, k_col = jax.random.split(key)
    # nn.init.uniform_ -> U[0, 1)
    row_embed = jax.random.uniform(k_row, (sz, num_pos_feats), dtype=jnp.float32)
    col_embed = jax.random.uniform(k_col, (sz, num_pos_feats), dtype=jnp.float32)

    pos = position_embedding_learned(col_embed, row_embed, bs)
    pos = jax.block_until_ready(pos)

    # Pure-JAX reference (mirrors the PyTorch forward exactly).
    x_emb = col_embed                                   # (w, C), indexed by arange(w)
    y_emb = row_embed                                   # (h, C), indexed by arange(h)
    ref = jnp.concatenate(
        [jnp.broadcast_to(x_emb[None, :, :], (sz, sz, num_pos_feats)),
         jnp.broadcast_to(y_emb[:, None, :], (sz, sz, num_pos_feats))],
        axis=-1,
    ).transpose(2, 0, 1)[None]
    ref = jnp.broadcast_to(ref, (bs, 2 * num_pos_feats, sz, sz))

    assert pos.shape == (bs, 2 * num_pos_feats, sz, sz)
    assert jnp.allclose(pos, ref), "mismatch vs pure-JAX reference"

    print("KERNEL_OK")
</pallas_src>

<mosaic_0001>
module attributes {stable_mosaic.version = 11 : i64} {
  func.func @pos_embed_kernel(%arg0: memref<16x128xf32, #tpu.memory_space<vmem>>, %arg1: memref<16x128xf32, #tpu.memory_space<vmem>>, %arg2: memref<2x16x16x128xf32, #tpu.memory_space<vmem>>) attributes {dimension_semantics = [], scalar_prefetch = 0 : i64, scratch_operands = 0 : i64, tpu.core_type = #tpu.core_type<tc>} {
    %c0 = arith.constant 0 : index
    %c0_0 = arith.constant 0 : index
    %0 = vector.load %arg0[%c0, %c0_0] : memref<16x128xf32, #tpu.memory_space<vmem>>, vector<16x128xf32>
    %c0_1 = arith.constant 0 : index
    %c0_2 = arith.constant 0 : index
    %1 = vector.load %arg1[%c0_1, %c0_2] : memref<16x128xf32, #tpu.memory_space<vmem>>, vector<16x128xf32>
    %2 = vector.shape_cast %0 : vector<16x128xf32> to vector<1x16x128xf32>
    %3 = vector.shape_cast %2 : vector<1x16x128xf32> to vector<1x16x128xf32>
    %4 = vector.broadcast %3 : vector<1x16x128xf32> to vector<16x16x128xf32>
    %c0_3 = arith.constant 0 : index
    %c0_4 = arith.constant 0 : index
    %c0_5 = arith.constant 0 : index
    %c0_6 = arith.constant 0 : index
    %5 = vector.load %arg2[%c0_3, %c0_4, %c0_5, %c0_6] : memref<2x16x16x128xf32, #tpu.memory_space<vmem>>, vector<1x16x16x128xf32>
    %6 = vector.shape_cast %5 : vector<1x16x16x128xf32> to vector<16x16x128xf32>
    %7 = vector.shape_cast %4 : vector<16x16x128xf32> to vector<1x16x16x128xf32>
    tpu.vector_store %arg2[%c0_3, %c0_4, %c0_5, %c0_6], %7 {strides = array<i32>} : memref<2x16x16x128xf32, #tpu.memory_space<vmem>>, vector<1x16x16x128xf32>,
    %8 = vector.shape_cast %1 : vector<16x128xf32> to vector<16x1x128xf32>
    %9 = vector.shape_cast %8 : vector<16x1x128xf32> to vector<16x1x128xf32>
    %10 = vector.broadcast %9 : vector<16x1x128xf32> to vector<16x16x128xf32>
    %c1 = arith.constant 1 : index
    %c0_7 = arith.constant 0 : index
    %c0_8 = arith.constant 0 : index
    %c0_9 = arith.constant 0 : index
    %11 = vector.load %arg2[%c1, %c0_7, %c0_8, %c0_9] : memref<2x16x16x128xf32, #tpu.memory_space<vmem>>, vector<1x16x16x128xf32>
    %12 = vector.shape_cast %11 : vector<1x16x16x128xf32> to vector<16x16x128xf32>
    %13 = vector.shape_cast %10 : vector<16x16x128xf32> to vector<1x16x16x128xf32>
    tpu.vector_store %arg2[%c1, %c0_7, %c0_8, %c0_9], %13 {strides = array<i32>} : memref<2x16x16x128xf32, #tpu.memory_space<vmem>>, vector<1x16x16x128xf32>,
    return
  }
}

</mosaic_0001>

<llo_original>
// kernel: position_embedding_learned.1
$region0: #{position_embedding_learned.1}
  #allocation0 [shape = 'u32[]', space=smem, size = 0x4, offset = 0x4, fixed_abs, tag = 'smem constant byte address 0x4 - core index']
  #allocation1 [shape = 'u32[144,128]{1,0:T(1,128)}', space=vmem, size = 0x12000, scoped, tag = 'internal scratch']
  %s0 = inlined_call_operand.hbm [shape: f32[16,128], index: 0, kind: input, shape index: {}]
  %s1 = inlined_call_operand.hbm [shape: f32[16,128], index: 1, kind: input, shape index: {}]
  %s2 = inlined_call_operand.vmem [shape: f32[2,16,16,128], index: 2, kind: output, shape index: {}]
  %s3 = sld [smem:[#allocation0]]
  $region26: #{position_embedding_learned.1} parent=0
    _
  %s5 = ssub.s32 1, %s3
  %s6 = scalar_select 0, %s5, %s3
  $region1: #{position_embedding_learned.1} parent=0
    #allocation2 [shape = 'u8[8192]{0}', space=vmem, size = 0x2000, scoped, tag = 'input window, operand 0, single buffered']
    #allocation3 [shape = 's32[1]{0}', space=sflag, size = 0x4, scoped, tag = 'scoped memory for position_embedding_learned.1']
    #allocation4 [shape = 'u8[8192]{0}', space=vmem, size = 0x2000, scoped, tag = 'input window, operand 1, single buffered']
    #allocation5 [shape = 's32[1]{0}', space=sflag, size = 0x4, scoped, tag = 'scoped memory for position_embedding_learned.1']
    %7 = vsyncpa [#allocation3], 0
    %8 = vsyncpa [#allocation5], 0
    // Predicated region
    $region2: #{position_embedding_learned.1} parent=1 // pred_check
      _
    $region3: #{position_embedding_learned.1} parent=1 // pred_check_branch
      %10 = sbr.rel (0) target = $region5
    $region4: #{position_embedding_learned.1} parent=1 // pred_region
      %s12 = ssub.s32 256, 256
      %13 = vsyncadd [#allocation3], %s12
      %s14 = sshll.u32 [#allocation2], 4
      %s15 = int_to_ptr.vmem [resolvable:$true] %s14
      %20 = dma.hbm_to_vmem [thread:$0]  %s0, 256, %s15, [#allocation3], 128, 128, 8
    $region5: #{position_embedding_learned.1} parent=1 // pred_fallthru
      _
    // Predicated region
    $region6: #{position_embedding_learned.1} parent=1 // pred_check
      _
    $region7: #{position_embedding_learned.1} parent=1 // pred_check_branch
      %22 = sbr.rel (0) target = $region9
    $region8: #{position_embedding_learned.1} parent=1 // pred_region
      %s24 = ssub.s32 256, 256
      %25 = vsyncadd [#allocation5], %s24
      %s26 = sshll.u32 [#allocation4], 4
      %s27 = int_to_ptr.vmem [resolvable:$true] %s26
      %32 = dma.hbm_to_vmem [thread:$0]  %s1, 256, %s27, [#allocation5], 128, 128, 8
    $region9: #{position_embedding_learned.1} parent=1 // pred_fallthru
      _
    // Predicated region
    $region10: #{position_embedding_learned.1} parent=1 // pred_check
      _
    $region11: #{position_embedding_learned.1} parent=1 // pred_check_branch
      %34 = sbr.rel (0) target = $region13
    $region12: #{position_embedding_learned.1} parent=1 // pred_region
      %35 = dma.done [#allocation3], 256
    $region13: #{position_embedding_learned.1} parent=1 // pred_fallthru
      _
    // Predicated region
    $region14: #{position_embedding_learned.1} parent=1 // pred_check
      _
    $region15: #{position_embedding_learned.1} parent=1 // pred_check_branch
      %37 = sbr.rel (0) target = $region17
    $region16: #{position_embedding_learned.1} parent=1 // pred_region
      %38 = dma.done [#allocation5], 256
    $region17: #{position_embedding_learned.1} parent=1 // pred_fallthru
      _
    %v39 = vld [vmem:[#allocation2] sm:$0xff]
    %v40 = vld [vmem:[#allocation2 + $0x8] sm:$0xff]
    %v41 = vld [vmem:[#allocation4] sm:$0xff]
    %v42 = vld [vmem:[#allocation4 + $0x8] sm:$0xff]
    %43 = vst [vmem:[%s2] sm:$0xff] %v39
    %44 = vst [vmem:[%s2 + $0x8] sm:$0xff] %v40
    %45 = vst [vmem:[%s2 + $0x10] sm:$0xff] %v39
    %46 = vst [vmem:[%s2 + $0x18] sm:$0xff] %v40
    %47 = vst [vmem:[%s2 + $0x20] sm:$0xff] %v39
    %48 = vst [vmem:[%s2 + $0x28] sm:$0xff] %v40
    %49 = vst [vmem:[%s2 + $0x30] sm:$0xff] %v39
    %50 = vst [vmem:[%s2 + $0x38] sm:$0xff] %v40
    %51 = vst [vmem:[%s2 + $0x40] sm:$0xff] %v39
    %52 = vst [vmem:[%s2 + $0x48] sm:$0xff] %v40
    %53 = vst [vmem:[%s2 + $0x50] sm:$0xff] %v39
    %54 = vst [vmem:[%s2 + $0x58] sm:$0xff] %v40
    %55 = vst [vmem:[%s2 + $0x60] sm:$0xff] %v39
    %56 = vst [vmem:[%s2 + $0x68] sm:$0xff] %v40
    %57 = vst [vmem:[%s2 + $0x70] sm:$0xff] %v39
    %58 = vst [vmem:[%s2 + $0x78] sm:$0xff] %v40
    %59 = vst [vmem:[%s2 + $0x80] sm:$0xff] %v39
    %60 = vst [vmem:[%s2 + $0x88] sm:$0xff] %v40
    %61 = vst [vmem:[%s2 + $0x90] sm:$0xff] %v39
    %62 = vst [vmem:[%s2 + $0x98] sm:$0xff] %v40
    %63 = vst [vmem:[%s2 + $0xa0] sm:$0xff] %v39
    %64 = vst [vmem:[%s2 + $0xa8] sm:$0xff] %v40
    %65 = vst [vmem:[%s2 + $0xb0] sm:$0xff] %v39
    %66 = vst [vmem:[%s2 + $0xb8] sm:$0xff] %v40
    %67 = vst [vmem:[%s2 + $0xc0] sm:$0xff] %v39
    %68 = vst [vmem:[%s2 + $0xc8] sm:$0xff] %v40
    %69 = vst [vmem:[%s2 + $0xd0] sm:$0xff] %v39
    %70 = vst [vmem:[%s2 + $0xd8] sm:$0xff] %v40
    %71 = vst [vmem:[%s2 + $0xe0] sm:$0xff] %v39
    %72 = vst [vmem:[%s2 + $0xe8] sm:$0xff] %v40
    %73 = vst [vmem:[%s2 + $0xf0] sm:$0xff] %v39
    %74 = vst [vmem:[%s2 + $0xf8] sm:$0xff] %v40
    %v77 = vcombine.high %v41, %v41
    %v79 = vunpack.c.l.s4 1966171168
    %v80 = vunpack.c.0.s8 %v79
    %v81 = vlaneseq
    %v82 = vshrl.u32 %v81, 7
    %v83 = vsub.s32 %v80, %v82
    %v84 = vrot.slane %v41, %v83
    %v86 = vunpack.c.l.s4 1966171168
    %v87 = vunpack.c.0.s8 %v86
    %v88 = vlaneseq
    %v89 = vshrl.u32 %v88, 7
    %v90 = vsub.s32 %v87, %v89
    %v91 = vrot.slane %v77, %v90
    %v92 = vcombine.high %v84, %v84
    %v93 = vcombine.high %v91, %v91
    %v95 = vunpack.c.l.s4 1966171168
    %v96 = vunpack.c.0.s8 %v95
    %v97 = vlaneseq
    %v98 = vshrl.u32 %v97, 7
    %v99 = vsub.s32 %v96, %v98
    %v100 = vrot.slane %v84, %v99
    %v102 = vunpack.c.l.s4 1966171168
    %v103 = vunpack.c.0.s8 %v102
    %v104 = vlaneseq
    %v105 = vshrl.u32 %v104, 7
    %v106 = vsub.s32 %v103, %v105
    %v107 = vrot.slane %v91, %v106
    %v109 = vunpack.c.l.s4 1966171168
    %v110 = vunpack.c.0.s8 %v109
    %v111 = vlaneseq
    %v112 = vshrl.u32 %v111, 7
    %v113 = vsub.s32 %v110, %v112
    %v114 = vrot.slane %v92, %v113
    %v116 = vunpack.c.l.s4 1966171168
    %v117 = vunpack.c.0.s8 %v116
    %v118 = vlaneseq
    %v119 = vshrl.u32 %v118, 7
    %v120 = vsub.s32 %v117, %v119
    %v121 = vrot.slane %v93, %v120
    %v122 = vcombine.high %v100, %v100
    %v123 = vcombine.high %v107, %v107
    %v124 = vcombine.high %v114, %v114
    %v125 = vcombine.high %v121, %v121
    %v126 = vcombine.high %v42, %v42
    %v128 = vunpack.c.l.s4 1966171168
    %v129 = vunpack.c.0.s8 %v128
    %v130 = vlaneseq
    %v131 = vshrl.u32 %v130, 7
    %v132 = vsub.s32 %v129, %v131
    %v133 = vrot.slane %v42, %v132
    %v135 = vunpack.c.l.s4 1966171168
    %v136 = vunpack.c.0.s8 %v135
    %v137 = vlaneseq
    %v138 = vshrl.u32 %v137, 7
    %v139 = vsub.s32 %v136, %v138
    %v140 = vrot.slane %v126, %v139
    %v141 = vcombine.high %v133, %v133
    %v142 = vcombine.high %v140, %v140
    %v144 = vunpack.c.l.s4 1966171168
    %v145 = vunpack.c.0.s8 %v144
    %v146 = vlaneseq
    %v147 = vshrl.u32 %v146, 7
    %v148 = vsub.s32 %v145, %v147
    %v149 = vrot.slane %v133, %v148
    %v151 = vunpack.c.l.s4 1966171168
    %v152 = vunpack.c.0.s8 %v151
    %v153 = vlaneseq
    %v154 = vshrl.u32 %v153, 7
    %v155 = vsub.s32 %v152, %v154
    %v156 = vrot.slane %v140, %v155
    %v158 = vunpack.c.l.s4 1966171168
    %v159 = vunpack.c.0.s8 %v158
    %v160 = vlaneseq
    %v161 = vshrl.u32 %v160, 7
    %v162 = vsub.s32 %v159, %v161
    %v163 = vrot.slane %v141, %v162
    %v165 = vunpack.c.l.s4 1966171168
    %v166 = vunpack.c.0.s8 %v165
    %v167 = vlaneseq
    %v168 = vshrl.u32 %v167, 7
    %v169 = vsub.s32 %v166, %v168
    %v170 = vrot.slane %v142, %v169
    %v171 = vcombine.high %v149, %v149
    %v172 = vcombine.high %v156, %v156
    %v173 = vcombine.high %v163, %v163
    %v174 = vcombine.high %v170, %v170
    %v175 = vlaneseq
    %v176 = vshrl.u32 %v175, 7
    %v177 = vsub.s32 0, %v176
    %v178 = vrot.slane %v100, %v177
    %v179 = vlaneseq
    %v180 = vshrl.u32 %v179, 7
    %v181 = vsub.s32 0, %v180
    %v182 = vrot.slane %v114, %v181
    %v183 = vlaneseq
    %v184 = vshrl.u32 %v183, 7
    %v185 = vsub.s32 0, %v184
    %v186 = vrot.slane %v122, %v185
    %v187 = vlaneseq
    %v188 = vshrl.u32 %v187, 7
    %v189 = vsub.s32 0, %v188
    %v190 = vrot.slane %v124, %v189
    %v191 = vlaneseq
    %v192 = vshrl.u32 %v191, 7
    %v193 = vsub.s32 0, %v192
    %v194 = vrot.slane %v107, %v193
    %v195 = vlaneseq
    %v196 = vshrl.u32 %v195, 7
    %v197 = vsub.s32 0, %v196
    %v198 = vrot.slane %v121, %v197
    %v199 = vlaneseq
    %v200 = vshrl.u32 %v199, 7
    %v201 = vsub.s32 0, %v200
    %v202 = vrot.slane %v123, %v201
    %v203 = vlaneseq
    %v204 = vshrl.u32 %v203, 7
    %v205 = vsub.s32 0, %v204
    %v206 = vrot.slane %v125, %v205
    %v207 = vlaneseq
    %v208 = vshrl.u32 %v207, 7
    %v209 = vsub.s32 0, %v208
    %v210 = vrot.slane %v149, %v209
    %v211 = vlaneseq
    %v212 = vshrl.u32 %v211, 7
    %v213 = vsub.s32 0, %v212
    %v214 = vrot.slane %v163, %v213
    %v215 = vlaneseq
    %v216 = vshrl.u32 %v215, 7
    %v217 = vsub.s32 0, %v216
    %v218 = vrot.slane %v171, %v217
    %v219 = vlaneseq
    %v220 = vshrl.u32 %v219, 7
    %v221 = vsub.s32 0, %v220
    %v222 = vrot.slane %v173, %v221
    %v223 = vlaneseq
    %v224 = vshrl.u32 %v223, 7
    %v225 = vsub.s32 0, %v224
    %v226 = vrot.slane %v156, %v225
    %v227 = vlaneseq
    %v228 = vshrl.u32 %v227, 7
    %v229 = vsub.s32 0, %v228
    %v230 = vrot.slane %v170, %v229
    %v231 = vlaneseq
    %v232 = vshrl.u32 %v231, 7
    %v233 = vsub.s32 0, %v232
    %v234 = vrot.slane %v172, %v233
    %v235 = vlaneseq
    %v236 = vshrl.u32 %v235, 7
    %v237 = vsub.s32 0, %v236
    %v238 = vrot.slane %v174, %v237
    %s255 = scalar_lea.vmem %s2, 256
    %256 = vst [vmem:[%s255] sm:$0xff] %v178
    %257 = vst [vmem:[%s255 + $0x8] sm:$0xff] %v178
    %258 = vst [vmem:[%s255 + $0x10] sm:$0xff] %v182
    %259 = vst [vmem:[%s255 + $0x18] sm:$0xff] %v182
    %260 = vst [vmem:[%s255 + $0x20] sm:$0xff] %v186
    %261 = vst [vmem:[%s255 + $0x28] sm:$0xff] %v186
    %262 = vst [vmem:[%s255 + $0x30] sm:$0xff] %v190
    %263 = vst [vmem:[%s255 + $0x38] sm:$0xff] %v190
    %264 = vst [vmem:[%s255 + $0x40] sm:$0xff] %v194
    %265 = vst [vmem:[%s255 + $0x48] sm:$0xff] %v194
    %266 = vst [vmem:[%s255 + $0x50] sm:$0xff] %v198
    %267 = vst [vmem:[%s255 + $0x58] sm:$0xff] %v198
    %268 = vst [vmem:[%s255 + $0x60] sm:$0xff] %v202
    %269 = vst [vmem:[%s255 + $0x68] sm:$0xff] %v202
    %270 = vst [vmem:[%s255 + $0x70] sm:$0xff] %v206
    %271 = vst [vmem:[%s255 + $0x78] sm:$0xff] %v206
    %272 = vst [vmem:[%s255 + $0x80] sm:$0xff] %v210
    %273 = vst [vmem:[%s255 + $0x88] sm:$0xff] %v210
    %274 = vst [vmem:[%s255 + $0x90] sm:$0xff] %v214
    %275 = vst [vmem:[%s255 + $0x98] sm:$0xff] %v214
    %276 = vst [vmem:[%s255 + $0xa0] sm:$0xff] %v218
    %277 = vst [vmem:[%s255 + $0xa8] sm:$0xff] %v218
    %278 = vst [vmem:[%s255 + $0xb0] sm:$0xff] %v222
    %279 = vst [vmem:[%s255 + $0xb8] sm:$0xff] %v222
    %280 = vst [vmem:[%s255 + $0xc0] sm:$0xff] %v226
    %281 = vst [vmem:[%s255 + $0xc8] sm:$0xff] %v226
    %282 = vst [vmem:[%s255 + $0xd0] sm:$0xff] %v230
    %283 = vst [vmem:[%s255 + $0xd8] sm:$0xff] %v230
    %284 = vst [vmem:[%s255 + $0xe0] sm:$0xff] %v234
    %285 = vst [vmem:[%s255 + $0xe8] sm:$0xff] %v234
    %286 = vst [vmem:[%s255 + $0xf0] sm:$0xff] %v238
    %287 = vst [vmem:[%s255 + $0xf8] sm:$0xff] %v238
    // Predicated region
    $region18: #{position_embedding_learned.1} parent=1 // pred_check
      _
    $region19: #{position_embedding_learned.1} parent=1 // pred_check_branch
      %289 = sbr.rel (0) target = $region21
    $region20: #{position_embedding_learned.1} parent=1 // pred_region
      _
    $region21: #{position_embedding_learned.1} parent=1 // pred_fallthru
      _
    // Predicated region
    $region22: #{position_embedding_learned.1} parent=1 // pred_check
      _
    $region23: #{position_embedding_learned.1} parent=1 // pred_check_branch
      %291 = sbr.rel (0) target = $region25
    $region24: #{position_embedding_learned.1} parent=1 // pred_region
      _
    $region25: #{position_embedding_learned.1} parent=1 // pred_fallthru
      _
    %292 = vsyncpa [#allocation3], 1
    %293 = vsyncpa [#allocation5], 1

</llo_original>
